<compile_context>
chip_gen: v7x
topology: tpu7x:2x2x1
jax: 0.10.0
libtpu: 0.0.40
codegen_flags: <defaults>
</compile_context>

<pallas_src>
import jax
import jax.numpy as jnp
from jax.experimental import pallas as pl
from jax.experimental.pallas import tpu as pltpu


def _pg_loss_kernel(logp_ref, tgt_ref, rew_ref, out_ref):
    # logp_ref: (tn, V) in native dtype; upcast per tile, accumulate in f32.
    logp = logp_ref[...].astype(jnp.float32)
    tgt = tgt_ref[...]                                   # (tn, 1) int32
    rew = rew_ref[...]                                   # (tn, 1) f32

    col = jax.lax.broadcasted_iota(jnp.int32, logp.shape, 1)   # lane indices
    sel = jnp.where(col == tgt, logp, jnp.zeros_like(logp))    # one-hot select
    row_vals = jnp.sum(sel, axis=1, keepdims=True)             # (tn, 1) gather
    out_ref[...] = row_vals * rew                              # per-row partials


def _pick_row_tile(n_rows, vocab, itemsize):
    """Largest sublane-aligned row tile whose double-buffered blocks fit VMEM."""
    budget = 24 * 1024 * 1024                 # block budget, v7x-safe
    v_pad = ((vocab + 127) // 128) * 128      # lane padding of the logp block
    # double-buffered logp block + (tgt, rew, out) blocks padded to 128 lanes
    per_row = 2 * (v_pad * itemsize + 3 * 128 * 4)
    cap = budget // max(per_row, 1)
    cap = int(max(8, min(2048, (cap // 8) * 8)))
    if n_rows <= cap:
        return n_rows                          # single full-extent block
    for t in range(cap, 7, -8):
        if n_rows % t == 0:
            return t                           # exact divisor, no padding
    return cap                                 # caller pads rows up to a multiple


def pg_loss(log_pred, target, reward, seq_len, *, row_tile=None):
    """Pallas implementation of PGLoss.forward. Returns a (1,)-shaped loss."""
    N, V = log_pred.shape
    B, T = target.shape
    assert N == B * T

    logp = log_pred                                   # keep native dtype (bf16 ok)
    tgt = target.reshape(N, 1).astype(jnp.int32)
    rew = reward.reshape(N, 1).astype(jnp.float32)

    itemsize = jnp.dtype(logp.dtype).itemsize
    tn = int(row_tile) if row_tile is not None else _pick_row_tile(N, V, itemsize)
    tn = min(tn, N)
    if tn < N:
        tn = max(8, (tn // 8) * 8)                    # sublane-aligned tile
    n_pad = ((N + tn - 1) // tn) * tn

    if n_pad != N:
        pad = n_pad - N
        logp = jnp.pad(logp, ((0, pad), (0, 0)))
        tgt = jnp.pad(tgt, ((0, pad), (0, 0)))
        rew = jnp.pad(rew, ((0, pad), (0, 0)))        # zero reward -> zero term

    out = pl.pallas_call(
        _pg_loss_kernel,
        out_shape=jax.ShapeDtypeStruct((n_pad, 1), jnp.float32),
        grid=(n_pad // tn,),
        in_specs=[
            pl.BlockSpec((tn, V), lambda i: (i, 0)),
            pl.BlockSpec((tn, 1), lambda i: (i, 0)),
            pl.BlockSpec((tn, 1), lambda i: (i, 0)),
        ],
        out_specs=pl.BlockSpec((tn, 1), lambda i: (i, 0)),
        compiler_params=pltpu.CompilerParams(
            dimension_semantics=("parallel",),
            vmem_limit_bytes=32 * 1024 * 1024,
        ),
    )(logp, tgt, rew)

    denom = seq_len.astype(jnp.float32) * jnp.float32(B)
    return (-jnp.sum(out) / denom).reshape(1)


def pg_loss_ref(log_pred, target, reward, seq_len):
    """Pure-JAX reference for verification."""
    N, V = log_pred.shape
    B, T = target.shape
    tgt = target.reshape(-1)
    target_pred = log_pred[jnp.arange(N), tgt]
    loss = target_pred * reward.reshape(-1)
    return (-jnp.sum(loss) / (seq_len.astype(jnp.float32) * B)).reshape(1)


if __name__ == "__main__":
    key = jax.random.PRNGKey(0)

    # Case 1: shapes implied by the module (batch=2, seq=8, node_count=32), f32.
    k1, k2, k3 = jax.random.split(key, 3)
    B, T, V = 2, 8, 32
    N = B * T
    logits = jax.random.normal(k1, (N, V), dtype=jnp.float32)
    log_pred = jax.nn.log_softmax(logits, axis=-1)
    target = jax.random.randint(k2, (B, T), 0, V, dtype=jnp.int32)
    reward = jax.random.uniform(k3, (B, T), dtype=jnp.float32)
    seq_len = jnp.array([T], dtype=jnp.float32)

    loss = jax.block_until_ready(pg_loss(log_pred, target, reward, seq_len))
    ref = pg_loss_ref(log_pred, target, reward, seq_len)
    assert jnp.allclose(loss, ref, atol=1e-5, rtol=1e-5), (loss, ref)

    # Case 2: multi-block grid + native bf16 streaming (forced small tile).
    k4, k5, k6 = jax.random.split(jax.random.PRNGKey(1), 3)
    B2, T2, V2 = 4, 16, 256
    N2 = B2 * T2
    logits2 = jax.random.normal(k4, (N2, V2), dtype=jnp.float32)
    log_pred2 = jax.nn.log_softmax(logits2, axis=-1).astype(jnp.bfloat16)
    target2 = jax.random.randint(k5, (B2, T2), 0, V2, dtype=jnp.int32)
    reward2 = jax.random.uniform(k6, (B2, T2), dtype=jnp.float32)
    seq_len2 = jnp.array([T2], dtype=jnp.float32)

    loss2 = jax.block_until_ready(
        pg_loss(log_pred2, target2, reward2, seq_len2, row_tile=8))
    ref2 = pg_loss_ref(log_pred2, target2, reward2, seq_len2)
    assert jnp.allclose(loss2, ref2, atol=1e-4, rtol=1e-4), (loss2, ref2)

    print("KERNEL_OK")
</pallas_src>

<mosaic_0001>
module attributes {stable_mosaic.version = 11 : i64} {
  func.func @_pg_loss_kernel(%arg0: i32, %arg1: memref<16x32xf32, #tpu.memory_space<vmem>>, %arg2: memref<16x1xi32, #tpu.memory_space<vmem>>, %arg3: memref<16x1xf32, #tpu.memory_space<vmem>>, %arg4: memref<16x1xf32, #tpu.memory_space<vmem>>) attributes {dimension_semantics = [#tpu.dimension_semantics<parallel>], iteration_bounds = array<i64: 1>, scalar_prefetch = 0 : i64, scratch_operands = 0 : i64, tpu.core_type = #tpu.core_type<tc>, window_params = [{transform_indices = @transform_0, window_bounds = array<i64: 16, 32>}, {transform_indices = @transform_1, window_bounds = array<i64: 16, 1>}, {transform_indices = @transform_2, window_bounds = array<i64: 16, 1>}, {transform_indices = @transform_3, window_bounds = array<i64: 16, 1>}]} {
    %c0 = arith.constant 0 : index
    %c0_0 = arith.constant 0 : index
    %0 = vector.load %arg1[%c0, %c0_0] : memref<16x32xf32, #tpu.memory_space<vmem>>, vector<16x32xf32>
    %c0_1 = arith.constant 0 : index
    %c0_2 = arith.constant 0 : index
    %1 = vector.load %arg2[%c0_1, %c0_2] : memref<16x1xi32, #tpu.memory_space<vmem>>, vector<16x1xi32>
    %c0_3 = arith.constant 0 : index
    %c0_4 = arith.constant 0 : index
    %2 = vector.load %arg3[%c0_3, %c0_4] : memref<16x1xf32, #tpu.memory_space<vmem>>, vector<16x1xf32>
    %3 = tpu.iota {dimensions = array<i32: 1>} : vector<16x32xi32>
    %4 = vector.broadcast %1 : vector<16x1xi32> to vector<16x32xi32>
    %5 = arith.cmpi eq, %3, %4 : vector<16x32xi32>
    %cst = arith.constant 0.000000e+00 : f32
    %6 = vector.broadcast %cst : f32 to vector<16x32xf32>
    %7 = arith.select %5, %0, %6 : vector<16x32xi1>, vector<16x32xf32>
    %cst_5 = arith.constant dense<0.000000e+00> : vector<16xf32>
    %8 = vector.multi_reduction <add>, %7, %cst_5 [1] : vector<16x32xf32> to vector<16xf32>
    %9 = vector.shape_cast %8 : vector<16xf32> to vector<16x1xf32>
    %10 = arith.mulf %9, %2 : vector<16x1xf32>
    %c0_6 = arith.constant 0 : index
    %c0_7 = arith.constant 0 : index
    %11 = vector.load %arg4[%c0_6, %c0_7] : memref<16x1xf32, #tpu.memory_space<vmem>>, vector<16x1xf32>
    tpu.vector_store %arg4[%c0_6, %c0_7], %10 {strides = array<i32>} : memref<16x1xf32, #tpu.memory_space<vmem>>, vector<16x1xf32>,
    return
  }
  func.func @transform_0(%arg0: i32) -> (i32, i32) {
    %c0_i32 = arith.constant 0 : i32
    %c0_i32_0 = arith.constant 0 : i32
    return %arg0, %c0_i32 : i32, i32
  }
  func.func @transform_1(%arg0: i32) -> (i32, i32) {
    %c0_i32 = arith.constant 0 : i32
    %c0_i32_0 = arith.constant 0 : i32
    return %arg0, %c0_i32 : i32, i32
  }
  func.func @transform_2(%arg0: i32) -> (i32, i32) {
    %c0_i32 = arith.constant 0 : i32
    %c0_i32_0 = arith.constant 0 : i32
    return %arg0, %c0_i32 : i32, i32
  }
  func.func @transform_3(%arg0: i32) -> (i32, i32) {
    %c0_i32 = arith.constant 0 : i32
    %c0_i32_0 = arith.constant 0 : i32
    return %arg0, %c0_i32 : i32, i32
  }
}

</mosaic_0001>

<llo_original>
// kernel: tpu_custom_call.1
$region0: #{tpu_custom_call.1}
  #allocation0 [shape = 'u32[]', space=smem, size = 0x4, offset = 0x4, fixed_abs, tag = 'smem constant byte address 0x4 - core index']
  #allocation1 [shape = 'u32[144,128]{1,0:T(1,128)}', space=vmem, size = 0x12000, scoped, tag = 'internal scratch']
  %s0 = inlined_call_operand.vmem [shape: f32[16,32], index: 0, kind: input, shape index: {}]
  %s1 = inlined_call_operand.vmem [shape: s32[16,1], index: 1, kind: input, shape index: {}]
  %s2 = inlined_call_operand.vmem [shape: f32[16,1], index: 2, kind: input, shape index: {}]
  %s3 = inlined_call_operand.vmem [shape: f32[16,1], index: 3, kind: output, shape index: {}]
  %s4 = sld [smem:[#allocation0]]
  $region22: #{tpu_custom_call.1} parent=0
    _
  %s6 = ssub.s32 1, %s4
  %s7 = scalar_select 0, %s6, %s4
  // Predicated region
  $region2: #{tpu_custom_call.1} parent=0 // pred_check
    _
  $region3: #{tpu_custom_call.1} parent=0 // pred_check_branch
    %9 = sbr.rel (0) target = $region5
  $region4: #{tpu_custom_call.1} parent=0 // pred_region
    _
  $region5: #{tpu_custom_call.1} parent=0 // pred_fallthru
    _
  // Predicated region
  $region6: #{tpu_custom_call.1} parent=0 // pred_check
    _
  $region7: #{tpu_custom_call.1} parent=0 // pred_check_branch
    %11 = sbr.rel (0) target = $region9
  $region8: #{tpu_custom_call.1} parent=0 // pred_region
    _
  $region9: #{tpu_custom_call.1} parent=0 // pred_fallthru
    _
  // Predicated region
  $region10: #{tpu_custom_call.1} parent=0 // pred_check
    _
  $region11: #{tpu_custom_call.1} parent=0 // pred_check_branch
    %13 = sbr.rel (0) target = $region13
  $region12: #{tpu_custom_call.1} parent=0 // pred_region
    _
  $region13: #{tpu_custom_call.1} parent=0 // pred_fallthru
    _
  %v14 = vld [vmem:[%s0] sm:$0xff]
  %v15 = vld [vmem:[%s0 + $0x8] sm:$0xff]
  %v16 = vld [vmem:[%s1] sm:$0xff]
  %v17 = vld [vmem:[%s1 + $0x8] sm:$0xff]
  %v18 = vld [vmem:[%s2] sm:$0xff]
  %v19 = vld [vmem:[%s2 + $0x8] sm:$0xff]
  %v20 = vlaneseq
  %v21 = vand.u32 %v20, 127
  %22 = vset.pattern.permute.xlu0 0
  %23 = vperm.xlu0 %22, %v16
  %v24 = vpop.permute.xlu0 %23
  %25 = vset.pattern.permute.xlu0 0
  %26 = vperm.xlu0 %25, %v17
  %v27 = vpop.permute.xlu0 %26
  %vm28 = vcmp.eq.s32.totalorder %v21, %v24
  %vm29 = vcmp.eq.s32.totalorder %v21, %v27
  %v30 = vsel %vm28, %v14, 0.0
  %v31 = vsel %vm29, %v15, 0.0
  %vm32 = vcmask 261120
  %v33 = vsel %vm32, %v30, 0.0
  %34 = vadd.xlane.f32.xlu0 %v33
  %v35 = vpop.xlane.xlu0 %34
  %v36 = vsel %vm32, %v31, 0.0
  %37 = vadd.xlane.f32.xlu0 %v36
  %v38 = vpop.xlane.xlu0 %37
  %v39 = vmul.f32 %v35, %v18
  %v40 = vmul.f32 %v38, %v19
  %vm41 = vcmask 7168
  %42 = vst.msk [vmem:[%s3] sm:$0xff] %vm41, %v39
  %43 = vst.msk [vmem:[%s3 + $0x8] sm:$0xff] %vm41, %v40
  // Predicated region
  $region14: #{tpu_custom_call.1} parent=0 // pred_check
    _
  $region15: #{tpu_custom_call.1} parent=0 // pred_check_branch
    %45 = sbr.rel (0) target = $region17
  $region16: #{tpu_custom_call.1} parent=0 // pred_region
    _
  $region17: #{tpu_custom_call.1} parent=0 // pred_fallthru
    _
  // Predicated region
  $region18: #{tpu_custom_call.1} parent=0 // pred_check
    _
  $region19: #{tpu_custom_call.1} parent=0 // pred_check_branch
    %47 = sbr.rel (0) target = $region21
  $region20: #{tpu_custom_call.1} parent=0 // pred_region
    _
  $region21: #{tpu_custom_call.1} parent=0 // pred_fallthru
    _

</llo_original>
